<compile_context>
chip_gen: v7x
topology: tpu7x:2x2x1
jax: 0.10.0
libtpu: 0.0.40
codegen_flags: <defaults>
</compile_context>

<pallas_src>
import math

import jax
import jax.numpy as jnp
from jax.experimental import pallas as pl
from jax.experimental.pallas import tpu as pltpu

_LANE = 128
_MAX_TILE = 65536  # max lanes per spatial tile (multiple of 128)


def _transformer_kernel(x_ref, w1_ref, w2_ref, o_ref):
    # x_ref : (C_in,  TM)    pixels on lanes, channels on sublanes
    # w1_ref: (C_mid, C_in)  conv1 weight (out, in)
    # w2_ref: (C_mid, C_mid) conv2 weight (out, in)
    # o_ref : (C_mid, TM)    lane-dense output tile
    x = x_ref[...]
    h = jnp.dot(w1_ref[...], x, preferred_element_type=jnp.float32)
    h = jnp.maximum(h, 0.0)  # ReLU
    y = jnp.dot(w2_ref[...], h, preferred_element_type=jnp.float32)
    o_ref[...] = y.astype(o_ref.dtype)


@jax.jit
def transformer_forward(x_nchw, w1, w2):
    """x_nchw: (N, C_in, H, W); w1: (C_mid, C_in, 1, 1); w2: (C_mid, C_mid, 1, 1)."""
    N, C_in, H, W = x_nchw.shape
    C_mid = w1.shape[0]
    hw = H * W

    # ---- spatial tiling: split the 128-lane groups of H*W as evenly as
    #      possible into tiles of at most _MAX_TILE lanes -------------------
    groups = pl.cdiv(hw, _LANE)                 # number of 128-lane groups
    max_groups = _MAX_TILE // _LANE
    n_spatial = pl.cdiv(groups, max_groups)     # target number of spatial tiles
    # Keep >= 2 total grid steps when possible so v7x's 2nd TensorCore works.
    if N * n_spatial < 2 and groups >= 2:
        n_spatial = 2
    groups_per_tile = pl.cdiv(groups, n_spatial)
    tile_m = groups_per_tile * _LANE
    grid_spatial = pl.cdiv(groups, groups_per_tile)

    # NCHW -> (N, C_in, H*W): pure reshape, no transpose, no padding pass.
    x3 = x_nchw.reshape(N, C_in, hw)

    # Conv 1x1 weights (out, in, 1, 1) -> (out, in); used as-is since y = W @ x.
    w1_mat = w1[:, :, 0, 0]
    w2_mat = w2[:, :, 0, 0]

    grid = (N, grid_spatial)

    flops = 2 * N * hw * (C_in * C_mid + C_mid * C_mid)
    bytes_accessed = (
        4 * N * grid_spatial * tile_m * (C_in + C_mid)
        + 4 * (C_mid * C_in + C_mid * C_mid)
    )

    out3 = pl.pallas_call(
        _transformer_kernel,
        out_shape=jax.ShapeDtypeStruct((N, C_mid, hw), x_nchw.dtype),
        grid_spec=pltpu.PrefetchScalarGridSpec(
            num_scalar_prefetch=0,
            grid=grid,
            in_specs=[
                # batch dim squeezed; spatial tiled along lanes (lane-dense)
                pl.BlockSpec((None, C_in, tile_m), lambda n, i: (n, 0, i)),
                # weights: constant block index -> fetched once, stay resident
                pl.BlockSpec((C_mid, C_in), lambda n, i: (0, 0)),
                pl.BlockSpec((C_mid, C_mid), lambda n, i: (0, 0)),
            ],
            out_specs=pl.BlockSpec((None, C_mid, tile_m), lambda n, i: (n, 0, i)),
        ),
        compiler_params=pltpu.CompilerParams(
            dimension_semantics=("parallel", "parallel"),
        ),
        cost_estimate=pl.CostEstimate(
            flops=flops, transcendentals=0, bytes_accessed=bytes_accessed
        ),
    )(x3, w1_mat, w2_mat)

    return out3.reshape(N, C_mid, H, W)


def xavier_normal(key, out_c, in_c):
    # torch.nn.init.xavier_normal_ for a 1x1 conv: std = sqrt(2 / (fan_in + fan_out))
    std = math.sqrt(2.0 / (in_c + out_c))
    return std * jax.random.normal(key, (out_c, in_c, 1, 1), dtype=jnp.float32)


if __name__ == "__main__":
    inp1, oup1 = 4, 8
    N, H, W = 2, 16, 16

    key = jax.random.PRNGKey(0)
    k_x, k_w1, k_w2 = jax.random.split(key, 3)

    x = jax.random.normal(k_x, (N, inp1, H, W), dtype=jnp.float32)
    w1 = xavier_normal(k_w1, oup1, inp1)   # conv1.weight: (oup1, inp1, 1, 1)
    w2 = xavier_normal(k_w2, oup1, oup1)   # conv2.weight: (oup1, oup1, 1, 1)

    out = transformer_forward(x, w1, w2)
    jax.block_until_ready(out)

    # Cross-check against a plain-JAX reference of the same math.
    def ref(x, w1, w2):
        w1m = w1[:, :, 0, 0]
        w2m = w2[:, :, 0, 0]
        h = jnp.maximum(jnp.einsum("oc,nchw->nohw", w1m, x), 0.0)
        return jnp.einsum("oc,nchw->nohw", w2m, h)

    expected = ref(x, w1, w2)
    assert out.shape == (N, oup1, H, W)
    assert jnp.allclose(out, expected, atol=1e-5, rtol=1e-5)

    print("KERNEL_OK")
</pallas_src>

<mosaic_0001>
module attributes {stable_mosaic.version = 11 : i64} {
  func.func @_transformer_kernel(%arg0: i32, %arg1: i32, %arg2: memref<1x4x256xf32, #tpu.memory_space<vmem>>, %arg3: memref<8x4xf32, #tpu.memory_space<vmem>>, %arg4: memref<8x8xf32, #tpu.memory_space<vmem>>, %arg5: memref<1x8x256xf32, #tpu.memory_space<vmem>>) attributes {dimension_semantics = [#tpu.dimension_semantics<parallel>, #tpu.dimension_semantics<parallel>], iteration_bounds = array<i64: 2, 1>, scalar_prefetch = 0 : i64, scratch_operands = 0 : i64, tpu.core_type = #tpu.core_type<tc>, window_params = [{transform_indices = @transform_0, window_bounds = array<i64: 1, 4, 256>}, {pipeline_mode = #tpu.pipeline_mode<synchronous>, transform_indices = @transform_1, window_bounds = array<i64: 8, 4>}, {pipeline_mode = #tpu.pipeline_mode<synchronous>, transform_indices = @transform_2, window_bounds = array<i64: 8, 8>}, {transform_indices = @transform_3, window_bounds = array<i64: 1, 8, 256>}]} {
    %c0 = arith.constant 0 : index
    %c0_0 = arith.constant 0 : index
    %c0_1 = arith.constant 0 : index
    %0 = vector.load %arg2[%c0, %c0_0, %c0_1] : memref<1x4x256xf32, #tpu.memory_space<vmem>>, vector<1x4x256xf32>
    %1 = vector.shape_cast %0 : vector<1x4x256xf32> to vector<4x256xf32>
    %c0_2 = arith.constant 0 : index
    %c0_3 = arith.constant 0 : index
    %2 = vector.load %arg3[%c0_2, %c0_3] : memref<8x4xf32, #tpu.memory_space<vmem>>, vector<8x4xf32>
    %cst = arith.constant dense<0.000000e+00> : vector<8x256xf32>
    %3 = tpu.matmul %2, %1, %cst {dimension_numbers = #tpu.dot_dimension_numbers<[1], [0], [0], [1], [0, 0, 1, 1], [], []>} : vector<8x4xf32>, vector<4x256xf32>, vector<8x256xf32> -> vector<8x256xf32>
    %cst_4 = arith.constant 0.000000e+00 : f32
    %4 = vector.broadcast %cst_4 : f32 to vector<8x256xf32>
    %5 = arith.maximumf %3, %4 : vector<8x256xf32>
    %c0_5 = arith.constant 0 : index
    %c0_6 = arith.constant 0 : index
    %6 = vector.load %arg4[%c0_5, %c0_6] : memref<8x8xf32, #tpu.memory_space<vmem>>, vector<8x8xf32>
    %cst_7 = arith.constant dense<0.000000e+00> : vector<8x256xf32>
    %7 = tpu.matmul %6, %5, %cst_7 {dimension_numbers = #tpu.dot_dimension_numbers<[1], [0], [0], [1], [0, 0, 1, 1], [], []>} : vector<8x8xf32>, vector<8x256xf32>, vector<8x256xf32> -> vector<8x256xf32>
    %c0_8 = arith.constant 0 : index
    %c0_9 = arith.constant 0 : index
    %c0_10 = arith.constant 0 : index
    %8 = vector.load %arg5[%c0_8, %c0_9, %c0_10] : memref<1x8x256xf32, #tpu.memory_space<vmem>>, vector<1x8x256xf32>
    %9 = vector.shape_cast %8 : vector<1x8x256xf32> to vector<8x256xf32>
    %10 = vector.shape_cast %7 : vector<8x256xf32> to vector<1x8x256xf32>
    tpu.vector_store %arg5[%c0_8, %c0_9, %c0_10], %10 {strides = array<i32>} : memref<1x8x256xf32, #tpu.memory_space<vmem>>, vector<1x8x256xf32>,
    return
  }
  func.func @transform_0(%arg0: i32, %arg1: i32) -> (i32, i32, i32) {
    %c0_i32 = arith.constant 0 : i32
    %c0_i32_0 = arith.constant 0 : i32
    return %arg0, %c0_i32, %arg1 : i32, i32, i32
  }
  func.func @transform_1(%arg0: i32, %arg1: i32) -> (i32, i32) {
    %c0_i32 = arith.constant 0 : i32
    %c0_i32_0 = arith.constant 0 : i32
    %c0_i32_1 = arith.constant 0 : i32
    return %c0_i32, %c0_i32_0 : i32, i32
  }
  func.func @transform_2(%arg0: i32, %arg1: i32) -> (i32, i32) {
    %c0_i32 = arith.constant 0 : i32
    %c0_i32_0 = arith.constant 0 : i32
    %c0_i32_1 = arith.constant 0 : i32
    return %c0_i32, %c0_i32_0 : i32, i32
  }
  func.func @transform_3(%arg0: i32, %arg1: i32) -> (i32, i32, i32) {
    %c0_i32 = arith.constant 0 : i32
    %c0_i32_0 = arith.constant 0 : i32
    return %arg0, %c0_i32, %arg1 : i32, i32, i32
  }
}

</mosaic_0001>

<llo_original>
// kernel: transformer_forward.1
$region0: #{transformer_forward.1}
  #allocation0 [shape = 'u32[]', space=smem, size = 0x4, offset = 0x4, fixed_abs, tag = 'smem constant byte address 0x4 - core index']
  #allocation1 [shape = 'u32[144,128]{1,0:T(1,128)}', space=vmem, size = 0x12000, scoped, tag = 'internal scratch']
  %s0 = inlined_call_operand.vmem [shape: f32[2,4,256], index: 0, kind: input, shape index: {}]
  %s1 = inlined_call_operand.vmem [shape: f32[8,4], index: 1, kind: input, shape index: {}]
  %s2 = inlined_call_operand.vmem [shape: f32[8,8], index: 2, kind: input, shape index: {}]
  %s3 = inlined_call_operand.vmem [shape: f32[2,8,256], index: 3, kind: output, shape index: {}]
  %s4 = sld [smem:[#allocation0]]
  $region45: #{transformer_forward.1} parent=0
    _
  %s6 = ssub.s32 1, %s4
  %s7 = scalar_select 0, %s6, %s4
  loop: start=0, step=1, limit=4
  $region2: #{transformer_forward.1} parent=0 // loop_pre_header
    _
  $region3: #{transformer_forward.1} parent=0 // loop_header
    %s9 = sphi 0, %s13
    %p10 = scmp.ge.s32.totalorder %s9, 4
    %s16 = sphi 0, %s28
    %s17 = sphi 0, %s24
    %s18 = sphi 0, %s16
    %s19 = sphi 0, %s17
    %s20 = sphi 0, %s18
    %s21 = sphi 0, %s19
    %s33 = sphi 0, %s35
    %s36 = sphi 0, %s33
    %s37 = sphi 0, %s36
    %s53 = sphi 0, %s37
    %s57 = sphi 0, %s57
    %s59 = sphi 0, %s57
    %s60 = sphi 0, %s59
    %s74 = sphi 0, %s60
    %s78 = sphi 0, %s78
    %s80 = sphi 0, %s78
    %s81 = sphi 0, %s80
    %s95 = sphi 0, %s81
    %s103 = sphi 0, %s105
    %s106 = sphi 0, %s103
    %s107 = sphi 0, %s106
    %s123 = sphi 0, %s107
  $region4: #{transformer_forward.1} parent=0 // loop_header_branch
    %12 = sbr.rel (%p10) target = $region8
  $region5: #{transformer_forward.1} parent=0 // loop_body
    %s14 = ssub.s32 %s9, 1
    %s15 = ssub.s32 %s9, 2
    %s22 = sadd.s32 1, %s17
    %p23 = scmp.ge.s32.totalorder %s22, 1
    %s24 = scalar_select %p23, 0, %s22
    %s25 = sadd.s32 1, %s16
    %s26 = scalar_select %p23, %s25, %s16
    %p27 = scmp.ge.s32.totalorder %s26, 2
    %s28 = scalar_select %p27, 0, %s26
    %s29 = ssub.s32 %s16, %s28
    %s30 = ssub.s32 %s17, %s24
    %s31 = sor.u32 %s29, %s30
    %p32 = scmp.eq.s32.totalorder %s31, 0
    %s34 = sadd.s32 %s33, 1
    %s35 = scalar_select %p32, %s33, %s34
    %p38 = pneg %p32
    %p39 = scmp.eq.s32.totalorder %s9, 1
    %p40 = por %p38, %p39
    %p41 = scmp.ne.s32.totalorder %s33, %s36
    %p42 = scmp.eq.s32.totalorder %s9, 0
    %p43 = por %p41, %p42
    %p44 = scmp.ne.s32.totalorder %s33, %s36
    %p45 = scmp.eq.s32.totalorder %s14, 1
    %p46 = por %p44, %p45
    %p47 = scmp.ne.s32.totalorder %s36, %s37
    %p48 = scmp.eq.s32.totalorder %s14, 0
    %p49 = por %p47, %p48
    %p50 = scmp.ne.s32.totalorder %s36, %s37
    %p51 = scmp.eq.s32.totalorder %s15, 1
    %p52 = por %p50, %p51
    %p54 = scmp.ne.s32.totalorder %s37, %s53
    %p55 = scmp.eq.s32.totalorder %s15, 0
    %p56 = por %p54, %p55
    %s58 = sadd.s32 %s57, 1
    %p61 = scmp.eq.s32.totalorder %s9, 1
    %p62 = scmp.ne.s32.totalorder %s57, %s59
    %p63 = scmp.eq.s32.totalorder %s9, 0
    %p64 = por %p62, %p63
    %p65 = scmp.ne.s32.totalorder %s57, %s59
    %p66 = scmp.eq.s32.totalorder %s14, 1
    %p67 = por %p65, %p66
    %p68 = scmp.ne.s32.totalorder %s59, %s60
    %p69 = scmp.eq.s32.totalorder %s14, 0
    %p70 = por %p68, %p69
    %p71 = scmp.ne.s32.totalorder %s59, %s60
    %p72 = scmp.eq.s32.totalorder %s15, 1
    %p73 = por %p71, %p72
    %p75 = scmp.ne.s32.totalorder %s60, %s74
    %p76 = scmp.eq.s32.totalorder %s15, 0
    %p77 = por %p75, %p76
    %s79 = sadd.s32 %s78, 1
    %p82 = scmp.eq.s32.totalorder %s9, 1
    %p83 = scmp.ne.s32.totalorder %s78, %s80
    %p84 = scmp.eq.s32.totalorder %s9, 0
    %p85 = por %p83, %p84
    %p86 = scmp.ne.s32.totalorder %s78, %s80
    %p87 = scmp.eq.s32.totalorder %s14, 1
    %p88 = por %p86, %p87
    %p89 = scmp.ne.s32.totalorder %s80, %s81
    %p90 = scmp.eq.s32.totalorder %s14, 0
    %p91 = por %p89, %p90
    %p92 = scmp.ne.s32.totalorder %s80, %s81
    %p93 = scmp.eq.s32.totalorder %s15, 1
    %p94 = por %p92, %p93
    %p96 = scmp.ne.s32.totalorder %s81, %s95
    %p97 = scmp.eq.s32.totalorder %s15, 0
    %p98 = por %p96, %p97
    %s99 = ssub.s32 %s16, %s28
    %s100 = ssub.s32 %s17, %s24
    %s101 = sor.u32 %s99, %s100
    %p102 = scmp.eq.s32.totalorder %s101, 0
    %s104 = sadd.s32 %s103, 1
    %s105 = scalar_select %p102, %s103, %s104
    %p108 = pneg %p102
    %p109 = scmp.eq.s32.totalorder %s9, 1
    %p110 = por %p108, %p109
    %p111 = scmp.ne.s32.totalorder %s103, %s106
    %p112 = scmp.eq.s32.totalorder %s9, 0
    %p113 = por %p111, %p112
    %p114 = scmp.ne.s32.totalorder %s103, %s106
    %p115 = scmp.eq.s32.totalorder %s14, 1
    %p116 = por %p114, %p115
    %p117 = scmp.ne.s32.totalorder %s106, %s107
    %p118 = scmp.eq.s32.totalorder %s14, 0
    %p119 = por %p117, %p118
    %p120 = scmp.ne.s32.totalorder %s106, %s107
    %p121 = scmp.eq.s32.totalorder %s15, 1
    %p122 = por %p120, %p121
    %p124 = scmp.ne.s32.totalorder %s107, %s123
    %p125 = scmp.eq.s32.totalorder %s15, 0
    %p126 = por %p124, %p125
    %p127 = scmp.le.s32.totalorder 1, %s9
    %p128 = scmp.lt.s32.totalorder %s9, 3
    %p129 = pnand %p127, %p128
    %p130 = pneg %p129
    // Predicated region
    $region9: #{transformer_forward.1} parent=5 // pred_check
      _
    $region10: #{transformer_forward.1} parent=5 // pred_check_branch
      %132 = sbr.rel (%p129) target = $region12
    $region11: #{transformer_forward.1} parent=5 // pred_region
      %s133 = ssub.s32 %s9, 1
      // Predicated region
      $region13: #{transformer_forward.1} parent=11 // pred_check
        %p134 = pneg %p70
      $region14: #{transformer_forward.1} parent=11 // pred_check_branch
        %136 = sbr.rel (%p134) target = $region16
      $region15: #{transformer_forward.1} parent=11 // pred_region
        _
      $region16: #{transformer_forward.1} parent=11 // pred_fallthru
        _
      // Predicated region
      $region17: #{transformer_forward.1} parent=11 // pred_check
        %p137 = pneg %p91
      $region18: #{transformer_forward.1} parent=11 // pred_check_branch
        %139 = sbr.rel (%p137) target = $region20
      $region19: #{transformer_forward.1} parent=11 // pred_region
        _
      $region20: #{transformer_forward.1} parent=11 // pred_fallthru
        _
    $region12: #{transformer_forward.1} parent=5 // pred_fallthru
      _
    %p140 = scmp.lt.s32.totalorder %s9, 2
    // Predicated region
    $region21: #{transformer_forward.1} parent=5 // pred_check
      %p141 = pneg %p140
    $region22: #{transformer_forward.1} parent=5 // pred_check_branch
      %143 = sbr.rel (%p141) target = $region24
    $region23: #{transformer_forward.1} parent=5 // pred_region
      // Predicated region
      $region25: #{transformer_forward.1} parent=23 // pred_check
        %p144 = pneg %p43
      $region26: #{transformer_forward.1} parent=23 // pred_check_branch
        %146 = sbr.rel (%p144) target = $region28
      $region27: #{transformer_forward.1} parent=23 // pred_region
        %s147 = smul.u32 2, %s17
        %p148 = scmp.lt.s32.totalorder %s16, 1
        %s149 = scalar_select %p148, %s16, 1
        %p150 = scmp.lt.s32.totalorder %s147, 1
        %s151 = scalar_select %p150, %s147, 1
        %s152 = smul.addr %s149, 2
        %s153 = sadd.s32 %s151, %s152
        %s154 = smul.addr %s153, 4
        %s155 = scalar_lea.vmem %s0, %s154
        %s156 = smul.u32 2, %s17
      $region28: #{transformer_forward.1} parent=23 // pred_fallthru
        _
    $region24: #{transformer_forward.1} parent=5 // pred_fallthru
      _
    %p157 = scmp.le.s32.totalorder 1, %s9
    %p158 = scmp.lt.s32.totalorder %s9, 3
    %p159 = pnand %p157, %p158
    %p160 = pneg %p159
    // Predicated region
    $region29: #{transformer_forward.1} parent=5 // pred_check
      _
    $region30: #{transformer_forward.1} parent=5 // pred_check_branch
      %162 = sbr.rel (%p159) target = $region32
    $region31: #{transformer_forward.1} parent=5 // pred_region
      %s163 = ssub.s32 %s9, 1
      %s164 = smul.u32 2, %s19
      %p165 = scmp.lt.s32.totalorder %s18, 1
      %s166 = scalar_select %p165, %s18, 1
      %p167 = scmp.lt.s32.totalorder %s164, 1
      %s168 = scalar_select %p167, %s164, 1
      %s169 = smul.addr %s166, 2
      %s170 = sadd.s32 %s168, %s169
      %s171 = smul.addr %s170, 4
      %s172 = scalar_lea.vmem %s0, %s171
      %p173 = pneg %p49
      %p174 = pneg %p46
      %p175 = pneg %p70
      %p176 = pneg %p67
      %p177 = pneg %p91
      %p178 = pneg %p88
      %p179 = pneg %p119
      %p180 = pneg %p116
      %s181 = smul.u32 2, %s19
      %p182 = scmp.lt.s32.totalorder %s18, 1
      %s183 = scalar_select %p182, %s18, 1
      %p184 = scmp.lt.s32.totalorder %s181, 1
      %s185 = scalar_select %p184, %s181, 1
      %s186 = smul.addr %s183, 2
      %s187 = sadd.s32 %s185, %s186
      %s188 = smul.addr %s187, 8
      %s189 = scalar_lea.vmem %s3, %s188
      %s190 = smul.u32 2, %s19
      %p191 = scmp.lt.s32.totalorder %s18, 1
      %s192 = scalar_select %p191, %s18, 1
      %p193 = scmp.lt.s32.totalorder %s190, 1
      %s194 = scalar_select %p193, %s190, 1
      %s195 = smul.addr %s192, 2
      %s196 = sadd.s32 %s194, %s195
      %s197 = smul.addr %s196, 4
      %s198 = scalar_lea.vmem %s0, %s197
      %s199 = smul.u32 2, %s19
      %s200 = smul.u32 2, %s19
      %p201 = scmp.lt.s32.totalorder %s18, 1
      %s202 = scalar_select %p201, %s18, 1
      %p203 = scmp.lt.s32.totalorder %s200, 1
      %s204 = scalar_select %p203, %s200, 1
      %s205 = smul.addr %s202, 2
      %s206 = sadd.s32 %s204, %s205
      %s207 = smul.addr %s206, 8
      %s208 = scalar_lea.vmem %s3, %s207
      %s209 = smul.u32 2, %s19
      %v210 = vld [vmem:[%s198] sm:$0xff]
      %v211 = vld [vmem:[%s1] sm:$0xff]
      %v213 = vcombine.high %v210, %v210
      %vm214 = vcmask 31744
      %v216 = vsel %vm214, %v211, 0
      %vm218 = vcmask 1043456
      %v219 = vsel %vm218, %v210, 0
      %v221 = vsel %vm218, %v213, 0
      %223 = vmatprep.subr.mxu0 %v221
      %224 = vmatpush1.msra.mxu0 %v219
      %225 = vmatprep.subr.mxu0 0.0
      %226 = vmatpush1.msra.mxu0 0.0
      %227 = vmatprep.subr.mxu0 0.0
      %228 = vmatpush1.msra.mxu0 0.0
      %229 = vmatprep.subr.mxu0 0.0
      %230 = vmatpush1.msra.mxu0 0.0
      %231 = vmatprep.subr.mxu0 0.0
      %232 = vmatpush1.msra.mxu0 0.0
      %233 = vmatprep.subr.mxu0 0.0
      %234 = vmatpush1.msra.mxu0 0.0
      %235 = vmatprep.subr.mxu0 0.0
      %236 = vmatpush1.msra.mxu0 0.0
      %237 = vmatprep.subr.mxu0 0.0
      %238 = vmatpush1.msra.mxu0 0.0
      %239 = vmatprep.subr.mxu0 0.0
      %240 = vmatpush1.msra.mxu0 0.0
      %241 = vmatprep.subr.mxu0 0.0
      %242 = vmatpush1.msra.mxu0 0.0
      %243 = vmatprep.subr.mxu0 0.0
      %244 = vmatpush1.msra.mxu0 0.0
      %245 = vmatprep.subr.mxu0 0.0
      %246 = vmatpush1.msra.mxu0 0.0
      %247 = vmatprep.subr.mxu0 0.0
      %248 = vmatpush1.msra.mxu0 0.0
      %249 = vmatprep.subr.mxu0 0.0
      %250 = vmatpush1.msra.mxu0 0.0
      %251 = vmatprep.subr.mxu0 0.0
      %252 = vmatpush1.msra.mxu0 0.0
      %253 = vmatprep.subr.mxu0 0.0
      %254 = vmatpush1.msra.mxu0 0.0
      %255 = vmatprep.subr.mxu0 0.0
      %256 = vmatpush1.msra.mxu0 0.0
      %257 = vmatprep.subr.mxu0 0.0
      %258 = vmatpush1.msra.mxu0 0.0
      %259 = vmatprep.subr.mxu0 0.0
      %260 = vmatpush1.msra.mxu0 0.0
      %261 = vmatprep.subr.mxu0 0.0
      %262 = vmatpush1.msra.mxu0 0.0
      %263 = vmatprep.subr.mxu0 0.0
      %264 = vmatpush1.msra.mxu0 0.0
      %265 = vmatprep.subr.mxu0 0.0
      %266 = vmatpush1.msra.mxu0 0.0
      %267 = vmatprep.subr.mxu0 0.0
      %268 = vmatpush1.msra.mxu0 0.0
      %269 = vmatprep.subr.mxu0 0.0
      %270 = vmatpush1.msra.mxu0 0.0
      %271 = vmatprep.subr.mxu0 0.0
      %272 = vmatpush1.msra.mxu0 0.0
      %273 = vmatprep.subr.mxu0 0.0
      %274 = vmatpush1.msra.mxu0 0.0
      %275 = vmatprep.subr.mxu0 0.0
      %276 = vmatpush1.msra.mxu0 0.0
      %277 = vmatprep.subr.mxu0 0.0
      %278 = vmatpush1.msra.mxu0 0.0
      %279 = vmatprep.subr.mxu0 0.0
      %280 = vmatpush1.msra.mxu0 0.0
      %281 = vmatprep.subr.mxu0 0.0
      %282 = vmatpush1.msra.mxu0 0.0
      %283 = vmatprep.subr.mxu0 0.0
      %284 = vmatpush1.msra.mxu0 0.0
      %285 = vmatprep.subr.mxu0 0.0
      %286 = vmatpush1.msra.mxu0 0.0
      %287 = vmatprep.mubr.f32.mxu0 0.0
      %288 = vmatmul.mubr.f32.gmra.mrb[0].mxu0 %v216
      %v289 = vpop.f32.mrb[0].mxu0
      %v290 = vadd.f32 0.0, %v289
      %v291 = vpop.f32.mrb[0].mxu0
      %v292 = vadd.f32 0.0, %v291
      %293 = vdwg.mxu0
      %v294 = vmax.f32 %v290, 0.0
      %v295 = vmax.f32 %v292, 0.0
      %v296 = vld [vmem:[%s2] sm:$0xff]
      %vm297 = vcmask 64512
      %v299 = vsel %vm297, %v296, 0
      %301 = vmatprep.subr.mxu0 %v295
      %302 = vmatpush1.msra.mxu0 %v294
      %303 = vmatprep.subr.mxu0 0.0
      %304 = vmatpush1.msra.mxu0 0.0
      %305 = vmatprep.subr.mxu0 0.0
      %306 = vmatpush1.msra.mxu0 0.0
      %307 = vmatprep.subr.mxu0 0.0
      %308 = vmatpush1.msra.mxu0 0.0
      %309 = vmatprep.subr.mxu0 0.0
      %310 = vmatpush1.msra.mxu0 0.0
      %311 = vmatprep.subr.mxu0 0.0
      %312 = vmatpush1.msra.mxu0 0.0
      %313 = vmatprep.subr.mxu0 0.0
      %314 = vmatpush1.msra.mxu0 0.0
      %315 = vmatprep.subr.mxu0 0.0
      %316 = vmatpush1.msra.mxu0 0.0
      %317 = vmatprep.subr.mxu0 0.0
      %318 = vmatpush1.msra.mxu0 0.0
      %319 = vmatprep.subr.mxu0 0.0
      %320 = vmatpush1.msra.mxu0 0.0
      %321 = vmatprep.subr.mxu0 0.0
      %322 = vmatpush1.msra.mxu0 0.0
      %323 = vmatprep.subr.mxu0 0.0
      %324 = vmatpush1.msra.mxu0 0.0
      %325 = vmatprep.subr.mxu0 0.0
      %326 = vmatpush1.msra.mxu0 0.0
      %327 = vmatprep.subr.mxu0 0.0
      %328 = vmatpush1.msra.mxu0 0.0
      %329 = vmatprep.subr.mxu0 0.0
      %330 = vmatpush1.msra.mxu0 0.0
      %331 = vmatprep.subr.mxu0 0.0
      %332 = vmatpush1.msra.mxu0 0.0
      %333 = vmatprep.subr.mxu0 0.0
      %334 = vmatpush1.msra.mxu0 0.0
      %335 = vmatprep.subr.mxu0 0.0
      %336 = vmatpush1.msra.mxu0 0.0
      %337 = vmatprep.subr.mxu0 0.0
      %338 = vmatpush1.msra.mxu0 0.0
      %339 = vmatprep.subr.mxu0 0.0
      %340 = vmatpush1.msra.mxu0 0.0
      %341 = vmatprep.subr.mxu0 0.0
      %342 = vmatpush1.msra.mxu0 0.0
      %343 = vmatprep.subr.mxu0 0.0
      %344 = vmatpush1.msra.mxu0 0.0
      %345 = vmatprep.subr.mxu0 0.0
      %346 = vmatpush1.msra.mxu0 0.0
      %347 = vmatprep.subr.mxu0 0.0
      %348 = vmatpush1.msra.mxu0 0.0
      %349 = vmatprep.subr.mxu0 0.0
      %350 = vmatpush1.msra.mxu0 0.0
      %351 = vmatprep.subr.mxu0 0.0
      %352 = vmatpush1.msra.mxu0 0.0
      %353 = vmatprep.subr.mxu0 0.0
      %354 = vmatpush1.msra.mxu0 0.0
      %355 = vmatprep.subr.mxu0 0.0
      %356 = vmatpush1.msra.mxu0 0.0
      %357 = vmatprep.subr.mxu0 0.0
      %358 = vmatpush1.msra.mxu0 0.0
      %359 = vmatprep.subr.mxu0 0.0
      %360 = vmatpush1.msra.mxu0 0.0
      %361 = vmatprep.subr.mxu0 0.0
      %362 = vmatpush1.msra.mxu0 0.0
      %363 = vmatprep.subr.mxu0 0.0
      %364 = vmatpush1.msra.mxu0 0.0
      %365 = vmatprep.mubr.f32.mxu0 0.0
      %366 = vmatmul.mubr.f32.gmra.mrb[0].mxu0 %v299
      %v367 = vpop.f32.mrb[0].mxu0
      %v368 = vadd.f32 0.0, %v367
      %v369 = vpop.f32.mrb[0].mxu0
      %v370 = vadd.f32 0.0, %v369
      %371 = vdwg.mxu0
      %372 = vst [vmem:[%s208] sm:$0xff] %v368
      %373 = vst [vmem:[%s208 + $0x8] sm:$0xff] %v370
      %s374 = smul.u32 2, %s19
      %p375 = scmp.lt.s32.totalorder %s18, 1
      %s376 = scalar_select %p375, %s18, 1
      %p377 = scmp.lt.s32.totalorder %s374, 1
      %s378 = scalar_select %p377, %s374, 1
      %s379 = smul.addr %s376, 2
      %s380 = sadd.s32 %s378, %s379
      %s381 = smul.addr %s380, 8
      %s382 = scalar_lea.vmem %s3, %s381
      // Predicated region
      $region33: #{transformer_forward.1} parent=31 // pred_check
        %p383 = pneg %p116
      $region34: #{transformer_forward.1} parent=31 // pred_check_branch
        %385 = sbr.rel (%p383) target = $region36
      $region35: #{transformer_forward.1} parent=31 // pred_region
        %s386 = smul.u32 2, %s19
      $region36: #{transformer_forward.1} parent=31 // pred_fallthru
        _
    $region32: #{transformer_forward.1} parent=5 // pred_fallthru
      _
    %p387 = scmp.le.s32.totalorder 2, %s9
    // Predicated region
    $region37: #{transformer_forward.1} parent=5 // pred_check
      %p388 = pneg %p387
    $region38: #{transformer_forward.1} parent=5 // pred_check_branch
      %390 = sbr.rel (%p388) target = $region40
    $region39: #{transformer_forward.1} parent=5 // pred_region
      %s391 = ssub.s32 %s9, 2
      // Predicated region
      $region41: #{transformer_forward.1} parent=39 // pred_check
        %p392 = pneg %p122
      $region42: #{transformer_forward.1} parent=39 // pred_check_branch
        %394 = sbr.rel (%p392) target = $region44
      $region43: #{transformer_forward.1} parent=39 // pred_region
        %s395 = smul.u32 2, %s21
        %p396 = scmp.lt.s32.totalorder %s20, 1
        %s397 = scalar_select %p396, %s20, 1
        %p398 = scmp.lt.s32.totalorder %s395, 1
        %s399 = scalar_select %p398, %s395, 1
        %s400 = smul.addr %s397, 2
        %s401 = sadd.s32 %s399, %s400
        %s402 = smul.addr %s401, 8
        %s403 = scalar_lea.vmem %s3, %s402
      $region44: #{transformer_forward.1} parent=39 // pred_fallthru
        _
    $region40: #{transformer_forward.1} parent=5 // pred_fallthru
      _
  $region6: #{transformer_forward.1} parent=0 // loop_footer
    %s13 = sadd.s32 1, %s9
  $region7: #{transformer_forward.1} parent=0 // loop_footer_branch
    %8 = sbr.rel target = $region3
  $region8: #{transformer_forward.1} parent=0 // loop_exit
    _

</llo_original>
